<compile_context>
chip_gen: v6e
topology: v6e:2x2x1
jax: 0.10.0
libtpu: 0.0.40
codegen_flags: <defaults>
</compile_context>

<pallas_src>
import functools

import jax
import jax.numpy as jnp
from jax.experimental import pallas as pl
from jax.experimental.pallas import tpu as pltpu


def _round_up(n, m):
    return ((n + m - 1) // m) * m


def _fused_mlp_kernel(x_ref, *refs, num_layers, operand_dtype):
    """Fused (Linear + LeakyReLU(0.2)) x (n-1) -> Linear + Sigmoid, one batch tile.

    refs = (w_1, b_1, ..., w_n, b_n, o_ref). Intermediate activations never leave
    VMEM/vregs; only the final layer's output is stored.
    """
    o_ref = refs[2 * num_layers]
    h = x_ref[...]                                    # operand_dtype (bf16 by default)
    for i in range(num_layers):
        w = refs[2 * i][...]                          # operand_dtype
        b = refs[2 * i + 1][...]                      # f32, (1, Dout_pad) -> broadcasts
        # MXU matmul with f32 accumulation; bias/activation in f32 on the VPU/EUP.
        y = jnp.dot(h, w, preferred_element_type=jnp.float32) + b
        if i == num_layers - 1:
            h = jax.nn.sigmoid(y)                     # final layer: Sigmoid (f32)
        else:
            y = jnp.maximum(y, 0.2 * y)               # exact LeakyReLU for slope in (0,1)
            h = y.astype(operand_dtype)               # operand for the next matmul
    o_ref[...] = h.astype(o_ref.dtype)


def prepare_discriminator_params(params, input_dim, operand_dtype=jnp.bfloat16):
    """Pad + cast all layer weights/biases ONCE (call this outside the step loop).

    params: list of (w, b) with w: (Din_i, Dout_i) f32, b: (Dout_i,) f32.
    Feature dims are zero-padded to multiples of 128 (lane-dense MXU tiles);
    zero padding is exactly neutral through the matmuls.
    """
    dims = [input_dim] + [w.shape[1] for (w, _) in params]
    pdims = [_round_up(d, 128) for d in dims]
    flat_wb = []
    for i, (w, b) in enumerate(params):
        w_p = (jnp.zeros((pdims[i], pdims[i + 1]), operand_dtype)
               .at[:dims[i], :dims[i + 1]].set(w.astype(operand_dtype)))
        b_p = (jnp.zeros((1, pdims[i + 1]), jnp.float32)
               .at[:, :dims[i + 1]].set(b.astype(jnp.float32)))
        flat_wb += [w_p, b_p]
    return {
        "dims": tuple(dims),
        "pdims": tuple(pdims),
        "flat_wb": tuple(flat_wb),
        "operand_dtype": operand_dtype,
    }


def _choose_batch_tiling(batch, batch_tile):
    """Pad batch to 8 sublanes; pick a tile so big batches give >=2 grid steps."""
    b_pad = _round_up(batch, 8)
    if b_pad > batch_tile:
        tb = batch_tile
        b_pad = _round_up(b_pad, tb)
    elif b_pad >= 256:
        # Split into >=2 grid steps so the "parallel" batch axis can shard across
        # v7x's two TensorCores; costs nothing on single-TC v5e/v6e.
        tb = _round_up(pl.cdiv(b_pad, 2), 8)
        b_pad = _round_up(b_pad, tb)
    else:
        tb = b_pad
    return b_pad, tb, b_pad // tb


def discriminator_forward(x, prepared, *, batch_tile=512):
    """x: (B, Din) f32. prepared: output of prepare_discriminator_params. -> (B, 1) f32."""
    dims, pdims = prepared["dims"], prepared["pdims"]
    flat_wb = prepared["flat_wb"]
    operand_dtype = prepared["operand_dtype"]
    n_layers = len(flat_wb) // 2

    B, Din = x.shape
    assert Din == dims[0], f"expected input dim {dims[0]}, got {Din}"
    B_pad, TB, n_tiles = _choose_batch_tiling(B, batch_tile)

    # Only per-call padding left is the activations themselves.
    x_p = (jnp.zeros((B_pad, pdims[0]), operand_dtype)
           .at[:B, :Din].set(x.astype(operand_dtype)))

    # VMEM budget: single-buffered resident weights/biases + double-buffered x/out tiles.
    op_bytes = jnp.dtype(operand_dtype).itemsize
    resident_bytes = sum(int(a.size) * a.dtype.itemsize for a in flat_wb)
    stream_bytes = 2 * TB * pdims[0] * op_bytes + 2 * TB * pdims[-1] * 4
    vmem_limit = int(min(64 << 20, max(32 << 20, 2 * (resident_bytes + stream_bytes))))

    kernel = functools.partial(
        _fused_mlp_kernel, num_layers=n_layers, operand_dtype=operand_dtype)
    out_shape = jax.ShapeDtypeStruct((B_pad, pdims[-1]), jnp.float32)
    compiler_params = pltpu.CompilerParams(
        dimension_semantics=("parallel",),
        vmem_limit_bytes=vmem_limit,
    )

    def build(single_buffer_weights):
        def resident_spec(shape):
            if single_buffer_weights:
                # Constant index_map => the tile never changes; double-buffering buys
                # nothing, so keep a single VMEM copy.
                return pl.BlockSpec(shape, lambda i: (0, 0), pipeline_mode=pl.Buffered(1))
            return pl.BlockSpec(shape, lambda i: (0, 0))

        in_specs = [pl.BlockSpec((TB, pdims[0]), lambda i: (i, 0))]
        for li in range(n_layers):
            in_specs.append(resident_spec((pdims[li], pdims[li + 1])))
            in_specs.append(resident_spec((1, pdims[li + 1])))
        out_spec = pl.BlockSpec((TB, pdims[-1]), lambda i: (i, 0))

        return pl.pallas_call(
            kernel,
            out_shape=out_shape,
            grid=(n_tiles,),
            in_specs=in_specs,
            out_specs=out_spec,
            compiler_params=compiler_params,
        )

    try:
        out_padded = build(True)(x_p, *flat_wb)
    except Exception:
        # pipeline_mode=pl.Buffered not supported by this jax build -> default buffering.
        out_padded = build(False)(x_p, *flat_wb)

    return out_padded[:B, :dims[-1]]


def init_discriminator_params(key, input_dim, hidden_dims):
    """Deterministic init mirroring nn.Linear default (uniform +/- 1/sqrt(fan_in))."""
    dims = [input_dim] + list(hidden_dims) + [1]
    params = []
    for i in range(len(dims) - 1):
        fan_in, fan_out = dims[i], dims[i + 1]
        key, kw, kb = jax.random.split(key, 3)
        bound = 1.0 / jnp.sqrt(fan_in)
        w = jax.random.uniform(kw, (fan_in, fan_out), jnp.float32, -bound, bound)
        b = jax.random.uniform(kb, (fan_out,), jnp.float32, -bound, bound)
        params.append((w, b))
    return params


if __name__ == "__main__":
    key = jax.random.PRNGKey(0)
    batch, input_dim = 8, 32
    hidden_dims = [64, 32]

    kx, kp = jax.random.split(key)
    x = jax.random.normal(kx, (batch, input_dim), jnp.float32)
    params = init_discriminator_params(kp, input_dim, hidden_dims)

    # One-time parameter padding/cast (hoisted out of the forward path).
    prepared = prepare_discriminator_params(params, input_dim, operand_dtype=jnp.bfloat16)

    out = discriminator_forward(x, prepared)
    out = jax.block_until_ready(out)
    assert out.shape == (batch, 1)

    # Reference 1: same bf16-operand / f32-accumulate recipe as the kernel (tight tol).
    ref_q = x.astype(jnp.bfloat16)
    for i, (w, b) in enumerate(params):
        y = jnp.dot(ref_q, w.astype(jnp.bfloat16),
                    preferred_element_type=jnp.float32) + b
        if i == len(params) - 1:
            ref_q = jax.nn.sigmoid(y)
        else:
            y = jnp.where(y > 0, y, 0.2 * y)
            ref_q = y.astype(jnp.bfloat16)
    assert jnp.allclose(out, ref_q, atol=1e-4, rtol=1e-4), "mismatch vs bf16 reference"

    # Reference 2: pure f32 math (loose tol covers bf16 operand quantization).
    ref = x
    for i, (w, b) in enumerate(params):
        ref = ref @ w + b
        if i == len(params) - 1:
            ref = jax.nn.sigmoid(ref)
        else:
            ref = jnp.where(ref > 0, ref, 0.2 * ref)
    assert jnp.allclose(out, ref, atol=3e-2), "mismatch vs f32 reference"

    print("KERNEL_OK")
</pallas_src>

<mosaic_0001>
module attributes {stable_mosaic.version = 11 : i64} {
  func.func @_fused_mlp_kernel(%arg0: i32, %arg1: memref<8x128xbf16, #tpu.memory_space<vmem>>, %arg2: memref<128x128xbf16, #tpu.memory_space<vmem>>, %arg3: memref<1x128xf32, #tpu.memory_space<vmem>>, %arg4: memref<128x128xbf16, #tpu.memory_space<vmem>>, %arg5: memref<1x128xf32, #tpu.memory_space<vmem>>, %arg6: memref<128x128xbf16, #tpu.memory_space<vmem>>, %arg7: memref<1x128xf32, #tpu.memory_space<vmem>>, %arg8: memref<8x128xf32, #tpu.memory_space<vmem>>) attributes {dimension_semantics = [#tpu.dimension_semantics<parallel>], iteration_bounds = array<i64: 1>, scalar_prefetch = 0 : i64, scratch_operands = 0 : i64, tpu.core_type = #tpu.core_type<tc>, window_params = [{transform_indices = @transform_0, window_bounds = array<i64: 8, 128>}, {pipeline_mode = #tpu.pipeline_mode<synchronous>, transform_indices = @transform_1, window_bounds = array<i64: 128, 128>}, {pipeline_mode = #tpu.pipeline_mode<synchronous>, transform_indices = @transform_2, window_bounds = array<i64: 1, 128>}, {pipeline_mode = #tpu.pipeline_mode<synchronous>, transform_indices = @transform_3, window_bounds = array<i64: 128, 128>}, {pipeline_mode = #tpu.pipeline_mode<synchronous>, transform_indices = @transform_4, window_bounds = array<i64: 1, 128>}, {pipeline_mode = #tpu.pipeline_mode<synchronous>, transform_indices = @transform_5, window_bounds = array<i64: 128, 128>}, {pipeline_mode = #tpu.pipeline_mode<synchronous>, transform_indices = @transform_6, window_bounds = array<i64: 1, 128>}, {transform_indices = @transform_7, window_bounds = array<i64: 8, 128>}]} {
    %c0 = arith.constant 0 : index
    %c0_0 = arith.constant 0 : index
    %0 = vector.load %arg1[%c0, %c0_0] : memref<8x128xbf16, #tpu.memory_space<vmem>>, vector<8x128xbf16>
    %c0_1 = arith.constant 0 : index
    %c0_2 = arith.constant 0 : index
    %1 = vector.load %arg2[%c0_1, %c0_2] : memref<128x128xbf16, #tpu.memory_space<vmem>>, vector<128x128xbf16>
    %c0_3 = arith.constant 0 : index
    %c0_4 = arith.constant 0 : index
    %2 = vector.load %arg3[%c0_3, %c0_4] : memref<1x128xf32, #tpu.memory_space<vmem>>, vector<1x128xf32>
    %cst = arith.constant dense<0.000000e+00> : vector<8x128xf32>
    %3 = tpu.matmul %0, %1, %cst {dimension_numbers = #tpu.dot_dimension_numbers<[1], [0], [0], [1], [0, 0, 1, 1], [], []>} : vector<8x128xbf16>, vector<128x128xbf16>, vector<8x128xf32> -> vector<8x128xf32>
    %4 = vector.broadcast %2 : vector<1x128xf32> to vector<8x128xf32>
    %5 = arith.addf %3, %4 : vector<8x128xf32>
    %cst_5 = arith.constant 2.000000e-01 : f32
    %6 = vector.broadcast %cst_5 : f32 to vector<8x128xf32>
    %7 = arith.mulf %6, %5 : vector<8x128xf32>
    %8 = arith.maximumf %5, %7 : vector<8x128xf32>
    %9 = arith.truncf %8 : vector<8x128xf32> to vector<8x128xbf16>
    %c0_6 = arith.constant 0 : index
    %c0_7 = arith.constant 0 : index
    %10 = vector.load %arg4[%c0_6, %c0_7] : memref<128x128xbf16, #tpu.memory_space<vmem>>, vector<128x128xbf16>
    %c0_8 = arith.constant 0 : index
    %c0_9 = arith.constant 0 : index
    %11 = vector.load %arg5[%c0_8, %c0_9] : memref<1x128xf32, #tpu.memory_space<vmem>>, vector<1x128xf32>
    %cst_10 = arith.constant dense<0.000000e+00> : vector<8x128xf32>
    %12 = tpu.matmul %9, %10, %cst_10 {dimension_numbers = #tpu.dot_dimension_numbers<[1], [0], [0], [1], [0, 0, 1, 1], [], []>} : vector<8x128xbf16>, vector<128x128xbf16>, vector<8x128xf32> -> vector<8x128xf32>
    %13 = vector.broadcast %11 : vector<1x128xf32> to vector<8x128xf32>
    %14 = arith.addf %12, %13 : vector<8x128xf32>
    %cst_11 = arith.constant 2.000000e-01 : f32
    %15 = vector.broadcast %cst_11 : f32 to vector<8x128xf32>
    %16 = arith.mulf %15, %14 : vector<8x128xf32>
    %17 = arith.maximumf %14, %16 : vector<8x128xf32>
    %18 = arith.truncf %17 : vector<8x128xf32> to vector<8x128xbf16>
    %c0_12 = arith.constant 0 : index
    %c0_13 = arith.constant 0 : index
    %19 = vector.load %arg6[%c0_12, %c0_13] : memref<128x128xbf16, #tpu.memory_space<vmem>>, vector<128x128xbf16>
    %c0_14 = arith.constant 0 : index
    %c0_15 = arith.constant 0 : index
    %20 = vector.load %arg7[%c0_14, %c0_15] : memref<1x128xf32, #tpu.memory_space<vmem>>, vector<1x128xf32>
    %cst_16 = arith.constant dense<0.000000e+00> : vector<8x128xf32>
    %21 = tpu.matmul %18, %19, %cst_16 {dimension_numbers = #tpu.dot_dimension_numbers<[1], [0], [0], [1], [0, 0, 1, 1], [], []>} : vector<8x128xbf16>, vector<128x128xbf16>, vector<8x128xf32> -> vector<8x128xf32>
    %22 = vector.broadcast %20 : vector<1x128xf32> to vector<8x128xf32>
    %23 = arith.addf %21, %22 : vector<8x128xf32>
    %24 = arith.negf %23 : vector<8x128xf32>
    %25 = math.exp %24 : vector<8x128xf32>
    %cst_17 = arith.constant 1.000000e+00 : f32
    %26 = vector.broadcast %cst_17 : f32 to vector<8x128xf32>
    %27 = arith.addf %26, %25 : vector<8x128xf32>
    %28 = arith.divf %26, %27 : vector<8x128xf32>
    %c0_18 = arith.constant 0 : index
    %c0_19 = arith.constant 0 : index
    %29 = vector.load %arg8[%c0_18, %c0_19] : memref<8x128xf32, #tpu.memory_space<vmem>>, vector<8x128xf32>
    tpu.vector_store %arg8[%c0_18, %c0_19], %28 {strides = array<i32>} : memref<8x128xf32, #tpu.memory_space<vmem>>, vector<8x128xf32>,
    return
  }
  func.func @transform_0(%arg0: i32) -> (i32, i32) {
    %c0_i32 = arith.constant 0 : i32
    %c0_i32_0 = arith.constant 0 : i32
    return %arg0, %c0_i32 : i32, i32
  }
  func.func @transform_1(%arg0: i32) -> (i32, i32) {
    %c0_i32 = arith.constant 0 : i32
    %c0_i32_0 = arith.constant 0 : i32
    %c0_i32_1 = arith.constant 0 : i32
    return %c0_i32, %c0_i32_0 : i32, i32
  }
  func.func @transform_2(%arg0: i32) -> (i32, i32) {
    %c0_i32 = arith.constant 0 : i32
    %c0_i32_0 = arith.constant 0 : i32
    %c0_i32_1 = arith.constant 0 : i32
    return %c0_i32, %c0_i32_0 : i32, i32
  }
  func.func @transform_3(%arg0: i32) -> (i32, i32) {
    %c0_i32 = arith.constant 0 : i32
    %c0_i32_0 = arith.constant 0 : i32
    %c0_i32_1 = arith.constant 0 : i32
    return %c0_i32, %c0_i32_0 : i32, i32
  }
  func.func @transform_4(%arg0: i32) -> (i32, i32) {
    %c0_i32 = arith.constant 0 : i32
    %c0_i32_0 = arith.constant 0 : i32
    %c0_i32_1 = arith.constant 0 : i32
    return %c0_i32, %c0_i32_0 : i32, i32
  }
  func.func @transform_5(%arg0: i32) -> (i32, i32) {
    %c0_i32 = arith.constant 0 : i32
    %c0_i32_0 = arith.constant 0 : i32
    %c0_i32_1 = arith.constant 0 : i32
    return %c0_i32, %c0_i32_0 : i32, i32
  }
  func.func @transform_6(%arg0: i32) -> (i32, i32) {
    %c0_i32 = arith.constant 0 : i32
    %c0_i32_0 = arith.constant 0 : i32
    %c0_i32_1 = arith.constant 0 : i32
    return %c0_i32, %c0_i32_0 : i32, i32
  }
  func.func @transform_7(%arg0: i32) -> (i32, i32) {
    %c0_i32 = arith.constant 0 : i32
    %c0_i32_0 = arith.constant 0 : i32
    return %arg0, %c0_i32 : i32, i32
  }
}

module attributes {stable_mosaic.version = 11 : i64} {
  func.func @_fused_mlp_kernel(%arg0: i32, %arg1: memref<8x128xbf16, #tpu.memory_space<vmem>>, %arg2: memref<128x128xbf16, #tpu.memory_space<vmem>>, %arg3: memref<1x128xf32, #tpu.memory_space<vmem>>, %arg4: memref<128x128xbf16, #tpu.memory_space<vmem>>, %arg5: memref<1x128xf32, #tpu.memory_space<vmem>>, %arg6: memref<128x128xbf16, #tpu.memory_space<vmem>>, %arg7: memref<1x128xf32, #tpu.memory_space<vmem>>, %arg8: memref<8x128xf32, #tpu.memory_space<vmem>>) attributes {dimension_semantics = [#tpu.dimension_semantics<parallel>], iteration_bounds = array<i64: 1>, scalar_prefetch = 0 : i64, scratch_operands = 0 : i64, tpu.core_type = #tpu.core_type<tc>, window_params = [{transform_indices = @transform_0, window_bounds = array<i64: 8, 128>}, {pipeline_mode = #tpu.pipeline_mode<synchronous>, transform_indices = @transform_1, window_bounds = array<i64: 128, 128>}, {pipeline_mode = #tpu.pipeline_mode<synchronous>, transform_indices = @transform_2, window_bounds = array<i64: 1, 128>}, {pipeline_mode = #tpu.pipeline_mode<synchronous>, transform_indices = @transform_3, window_bounds = array<i64: 128, 128>}, {pipeline_mode = #tpu.pipeline_mode<synchronous>, transform_indices = @transform_4, window_bounds = array<i64: 1, 128>}, {pipeline_mode = #tpu.pipeline_mode<synchronous>, transform_indices = @transform_5, window_bounds = array<i64: 128, 128>}, {pipeline_mode = #tpu.pipeline_mode<synchronous>, transform_indices = @transform_6, window_bounds = array<i64: 1, 128>}, {transform_indices = @transform_7, window_bounds = array<i64: 8, 128>}]} {
    %c0 = arith.constant 0 : index
    %c0_0 = arith.constant 0 : index
    %0 = vector.load %arg1[%c0, %c0_0] : memref<8x128xbf16, #tpu.memory_space<vmem>>, vector<8x128xbf16>
    %c0_1 = arith.constant 0 : index
    %c0_2 = arith.constant 0 : index
    %1 = vector.load %arg2[%c0_1, %c0_2] : memref<128x128xbf16, #tpu.memory_space<vmem>>, vector<128x128xbf16>
    %c0_3 = arith.constant 0 : index
    %c0_4 = arith.constant 0 : index
    %2 = vector.load %arg3[%c0_3, %c0_4] : memref<1x128xf32, #tpu.memory_space<vmem>>, vector<1x128xf32>
    %cst = arith.constant dense<0.000000e+00> : vector<8x128xf32>
    %3 = tpu.matmul %0, %1, %cst {dimension_numbers = #tpu.dot_dimension_numbers<[1], [0], [0], [1], [0, 0, 1, 1], [], []>} : vector<8x128xbf16>, vector<128x128xbf16>, vector<8x128xf32> -> vector<8x128xf32>
    %4 = vector.broadcast %2 : vector<1x128xf32> to vector<8x128xf32>
    %5 = arith.addf %3, %4 : vector<8x128xf32>
    %cst_5 = arith.constant 2.000000e-01 : f32
    %6 = vector.broadcast %cst_5 : f32 to vector<8x128xf32>
    %7 = arith.mulf %6, %5 : vector<8x128xf32>
    %8 = arith.maximumf %5, %7 : vector<8x128xf32>
    %9 = arith.truncf %8 : vector<8x128xf32> to vector<8x128xbf16>
    %c0_6 = arith.constant 0 : index
    %c0_7 = arith.constant 0 : index
    %10 = vector.load %arg4[%c0_6, %c0_7] : memref<128x128xbf16, #tpu.memory_space<vmem>>, vector<128x128xbf16>
    %c0_8 = arith.constant 0 : index
    %c0_9 = arith.constant 0 : index
    %11 = vector.load %arg5[%c0_8, %c0_9] : memref<1x128xf32, #tpu.memory_space<vmem>>, vector<1x128xf32>
    %cst_10 = arith.constant dense<0.000000e+00> : vector<8x128xf32>
    %12 = tpu.matmul %9, %10, %cst_10 {dimension_numbers = #tpu.dot_dimension_numbers<[1], [0], [0], [1], [0, 0, 1, 1], [], []>} : vector<8x128xbf16>, vector<128x128xbf16>, vector<8x128xf32> -> vector<8x128xf32>
    %13 = vector.broadcast %11 : vector<1x128xf32> to vector<8x128xf32>
    %14 = arith.addf %12, %13 : vector<8x128xf32>
    %cst_11 = arith.constant 2.000000e-01 : f32
    %15 = vector.broadcast %cst_11 : f32 to vector<8x128xf32>
    %16 = arith.mulf %15, %14 : vector<8x128xf32>
    %17 = arith.maximumf %14, %16 : vector<8x128xf32>
    %18 = arith.truncf %17 : vector<8x128xf32> to vector<8x128xbf16>
    %c0_12 = arith.constant 0 : index
    %c0_13 = arith.constant 0 : index
    %19 = vector.load %arg6[%c0_12, %c0_13] : memref<128x128xbf16, #tpu.memory_space<vmem>>, vector<128x128xbf16>
    %c0_14 = arith.constant 0 : index
    %c0_15 = arith.constant 0 : index
    %20 = vector.load %arg7[%c0_14, %c0_15] : memref<1x128xf32, #tpu.memory_space<vmem>>, vector<1x128xf32>
    %cst_16 = arith.constant dense<0.000000e+00> : vector<8x128xf32>
    %21 = tpu.matmul %18, %19, %cst_16 {dimension_numbers = #tpu.dot_dimension_numbers<[1], [0], [0], [1], [0, 0, 1, 1], [], []>} : vector<8x128xbf16>, vector<128x128xbf16>, vector<8x128xf32> -> vector<8x128xf32>
    %22 = vector.broadcast %20 : vector<1x128xf32> to vector<8x128xf32>
    %23 = arith.addf %21, %22 : vector<8x128xf32>
    %24 = arith.negf %23 : vector<8x128xf32>
    %25 = math.exp %24 : vector<8x128xf32>
    %cst_17 = arith.constant 1.000000e+00 : f32
    %26 = vector.broadcast %cst_17 : f32 to vector<8x128xf32>
    %27 = arith.addf %26, %25 : vector<8x128xf32>
    %28 = arith.divf %26, %27 : vector<8x128xf32>
    %c0_18 = arith.constant 0 : index
    %c0_19 = arith.constant 0 : index
    %29 = vector.load %arg8[%c0_18, %c0_19] : memref<8x128xf32, #tpu.memory_space<vmem>>, vector<8x128xf32>
    tpu.vector_store %arg8[%c0_18, %c0_19], %28 {strides = array<i32>} : memref<8x128xf32, #tpu.memory_space<vmem>>, vector<8x128xf32>,
    return
  }
  func.func @transform_0(%arg0: i32) -> (i32, i32) {
    %c0_i32 = arith.constant 0 : i32
    %c0_i32_0 = arith.constant 0 : i32
    return %arg0, %c0_i32 : i32, i32
  }
  func.func @transform_1(%arg0: i32) -> (i32, i32) {
    %c0_i32 = arith.constant 0 : i32
    %c0_i32_0 = arith.constant 0 : i32
    %c0_i32_1 = arith.constant 0 : i32
    return %c0_i32, %c0_i32_0 : i32, i32
  }
  func.func @transform_2(%arg0: i32) -> (i32, i32) {
    %c0_i32 = arith.constant 0 : i32
    %c0_i32_0 = arith.constant 0 : i32
    %c0_i32_1 = arith.constant 0 : i32
    return %c0_i32, %c0_i32_0 : i32, i32
  }
  func.func @transform_3(%arg0: i32) -> (i32, i32) {
    %c0_i32 = arith.constant 0 : i32
    %c0_i32_0 = arith.constant 0 : i32
    %c0_i32_1 = arith.constant 0 : i32
    return %c0_i32, %c0_i32_0 : i32, i32
  }
  func.func @transform_4(%arg0: i32) -> (i32, i32) {
    %c0_i32 = arith.constant 0 : i32
    %c0_i32_0 = arith.constant 0 : i32
    %c0_i32_1 = arith.constant 0 : i32
    return %c0_i32, %c0_i32_0 : i32, i32
  }
  func.func @transform_5(%arg0: i32) -> (i32, i32) {
    %c0_i32 = arith.constant 0 : i32
    %c0_i32_0 = arith.constant 0 : i32
    %c0_i32_1 = arith.constant 0 : i32
    return %c0_i32, %c0_i32_0 : i32, i32
  }
  func.func @transform_6(%arg0: i32) -> (i32, i32) {
    %c0_i32 = arith.constant 0 : i32
    %c0_i32_0 = arith.constant 0 : i32
    %c0_i32_1 = arith.constant 0 : i32
    return %c0_i32, %c0_i32_0 : i32, i32
  }
  func.func @transform_7(%arg0: i32) -> (i32, i32) {
    %c0_i32 = arith.constant 0 : i32
    %c0_i32_0 = arith.constant 0 : i32
    return %arg0, %c0_i32 : i32, i32
  }
}

</mosaic_0001>

<llo_original>
// kernel: tpu_custom_call.1
$region0: #{tpu_custom_call.1}
  #allocation0 [shape = 'u32[]', space=smem, size = 0x4, offset = 0x4, fixed_abs, tag = 'smem constant byte address 0x4 - core index']
  #allocation1 [shape = 'u32[144,128]{1,0:T(1,128)}', space=vmem, size = 0x12000, scoped, tag = 'internal scratch']
  %s0 = inlined_call_operand.hbm [shape: bf16[8,128], index: 0, kind: input, shape index: {}]
  %s1 = inlined_call_operand.hbm [shape: bf16[128,128], index: 1, kind: input, shape index: {}]
  %s2 = inlined_call_operand.vmem [shape: f32[1,128], index: 2, kind: input, shape index: {}]
  %s3 = inlined_call_operand.hbm [shape: bf16[128,128], index: 3, kind: input, shape index: {}]
  %s4 = inlined_call_operand.vmem [shape: f32[1,128], index: 4, kind: input, shape index: {}]
  %s5 = inlined_call_operand.hbm [shape: bf16[128,128], index: 5, kind: input, shape index: {}]
  %s6 = inlined_call_operand.vmem [shape: f32[1,128], index: 6, kind: input, shape index: {}]
  %s7 = inlined_call_operand.hbm [shape: f32[8,128], index: 7, kind: output, shape index: {}]
  %s8 = sld [smem:[#allocation0]]
  $region54: #{tpu_custom_call.1} parent=0
    _
  %s10 = ssub.s32 1, %s8
  %s11 = scalar_select 0, %s10, %s8
  $region1: #{tpu_custom_call.1} parent=0
    #allocation2 [shape = 'u8[2048]{0}', space=vmem, size = 0x800, scoped, tag = 'input window, operand 0, single buffered']
    #allocation3 [shape = 's32[1]{0}', space=sflag, size = 0x4, scoped, tag = 'scoped memory for tpu_custom_call.1']
    #allocation4 [shape = 's32[1]{0}', space=sflag, size = 0x4, scoped, tag = 'scoped memory for tpu_custom_call.1']
    #allocation5 [shape = 'u8[32768]{0}', space=vmem, size = 0x8000, scoped, tag = 'input window, operand 1, single buffered']
    #allocation6 [shape = 's32[1]{0}', space=sflag, size = 0x4, scoped, tag = 'scoped memory for tpu_custom_call.1']
    #allocation7 [shape = 'u8[32768]{0}', space=vmem, size = 0x8000, scoped, tag = 'input window, operand 3, single buffered']
    #allocation8 [shape = 'u8[32768]{0}', space=vmem, size = 0x8000, scoped, tag = 'input window, operand 5, single buffered']
    #allocation9 [shape = 's32[1]{0}', space=sflag, size = 0x4, scoped, tag = 'scoped memory for tpu_custom_call.1']
    #allocation10 [shape = 'u8[4096]{0}', space=vmem, size = 0x1000, scoped, tag = 'output window, operand 0, single buffered']
    %12 = vsyncpa [#allocation3], 0
    %13 = vsyncpa [#allocation6], 0
    %14 = vsyncpa [#allocation9], 0
    %15 = vsyncpa [#allocation4], 0
    // Predicated region
    $region2: #{tpu_custom_call.1} parent=1 // pred_check
      _
    $region3: #{tpu_custom_call.1} parent=1 // pred_check_branch
      %17 = sbr.rel (0) target = $region5
    $region4: #{tpu_custom_call.1} parent=1 // pred_region
      %s19 = ssub.s32 64, 64
      %20 = vsyncadd [#allocation3], %s19
      %s22 = sshll.u32 [#allocation2], 4
      %s23 = int_to_ptr.vmem [resolvable:$true] %s22
      %25 = dma.hbm_to_vmem [thread:$0]  %s0, 64, %s23, [#allocation3]
    $region5: #{tpu_custom_call.1} parent=1 // pred_fallthru
      _
    // Predicated region
    $region6: #{tpu_custom_call.1} parent=1 // pred_check
      _
    $region7: #{tpu_custom_call.1} parent=1 // pred_check_branch
      %27 = sbr.rel (0) target = $region9
    $region8: #{tpu_custom_call.1} parent=1 // pred_region
      %s29 = ssub.s32 1024, 1024
      %30 = vsyncadd [#allocation6], %s29
      %s31 = sshll.u32 [#allocation5], 4
      %s32 = int_to_ptr.vmem [resolvable:$true] %s31
      %37 = dma.hbm_to_vmem [thread:$0]  %s1, 1024, %s32, [#allocation6], 64, 64, 4
    $region9: #{tpu_custom_call.1} parent=1 // pred_fallthru
      _
    // Predicated region
    $region10: #{tpu_custom_call.1} parent=1 // pred_check
      _
    $region11: #{tpu_custom_call.1} parent=1 // pred_check_branch
      %39 = sbr.rel (0) target = $region13
    $region12: #{tpu_custom_call.1} parent=1 // pred_region
      _
    $region13: #{tpu_custom_call.1} parent=1 // pred_fallthru
      _
    // Predicated region
    $region14: #{tpu_custom_call.1} parent=1 // pred_check
      _
    $region15: #{tpu_custom_call.1} parent=1 // pred_check_branch
      %41 = sbr.rel (0) target = $region17
    $region16: #{tpu_custom_call.1} parent=1 // pred_region
      %s43 = ssub.s32 1024, 1024
      %44 = vsyncadd [#allocation6], %s43
      %s45 = sshll.u32 [#allocation7], 4
      %s46 = int_to_ptr.vmem [resolvable:$true] %s45
      %51 = dma.hbm_to_vmem [thread:$0]  %s3, 1024, %s46, [#allocation6], 64, 64, 4
    $region17: #{tpu_custom_call.1} parent=1 // pred_fallthru
      _
    // Predicated region
    $region18: #{tpu_custom_call.1} parent=1 // pred_check
      _
    $region19: #{tpu_custom_call.1} parent=1 // pred_check_branch
      %53 = sbr.rel (0) target = $region21
    $region20: #{tpu_custom_call.1} parent=1 // pred_region
      _
    $region21: #{tpu_custom_call.1} parent=1 // pred_fallthru
      _
    // Predicated region
    $region22: #{tpu_custom_call.1} parent=1 // pred_check
      _
    $region23: #{tpu_custom_call.1} parent=1 // pred_check_branch
      %55 = sbr.rel (0) target = $region25
    $region24: #{tpu_custom_call.1} parent=1 // pred_region
      %s57 = ssub.s32 1024, 1024
      %58 = vsyncadd [#allocation9], %s57
      %s59 = sshll.u32 [#allocation8], 4
      %s60 = int_to_ptr.vmem [resolvable:$true] %s59
      %65 = dma.hbm_to_vmem [thread:$0]  %s5, 1024, %s60, [#allocation9], 64, 64, 4
    $region25: #{tpu_custom_call.1} parent=1 // pred_fallthru
      _
    // Predicated region
    $region26: #{tpu_custom_call.1} parent=1 // pred_check
      _
    $region27: #{tpu_custom_call.1} parent=1 // pred_check_branch
      %67 = sbr.rel (0) target = $region29
    $region28: #{tpu_custom_call.1} parent=1 // pred_region
      _
    $region29: #{tpu_custom_call.1} parent=1 // pred_fallthru
      _
    // Predicated region
    $region30: #{tpu_custom_call.1} parent=1 // pred_check
      _
    $region31: #{tpu_custom_call.1} parent=1 // pred_check_branch
      %69 = sbr.rel (0) target = $region33
    $region32: #{tpu_custom_call.1} parent=1 // pred_region
      %70 = dma.done [#allocation3], 64
    $region33: #{tpu_custom_call.1} parent=1 // pred_fallthru
      _
    // Predicated region
    $region34: #{tpu_custom_call.1} parent=1 // pred_check
      _
    $region35: #{tpu_custom_call.1} parent=1 // pred_check_branch
      %72 = sbr.rel (0) target = $region37
    $region36: #{tpu_custom_call.1} parent=1 // pred_region
      %73 = dma.done [#allocation6], 1024
    $region37: #{tpu_custom_call.1} parent=1 // pred_fallthru
      _
    // Predicated region
    $region38: #{tpu_custom_call.1} parent=1 // pred_check
      _
    $region39: #{tpu_custom_call.1} parent=1 // pred_check_branch
      %75 = sbr.rel (0) target = $region41
    $region40: #{tpu_custom_call.1} parent=1 // pred_region
      %76 = dma.done [#allocation6], 1024
    $region41: #{tpu_custom_call.1} parent=1 // pred_fallthru
      _
    // Predicated region
    $region42: #{tpu_custom_call.1} parent=1 // pred_check
      _
    $region43: #{tpu_custom_call.1} parent=1 // pred_check_branch
      %78 = sbr.rel (0) target = $region45
    $region44: #{tpu_custom_call.1} parent=1 // pred_region
      %79 = dma.done [#allocation9], 1024
    $region45: #{tpu_custom_call.1} parent=1 // pred_fallthru
      _
    %v81 = vld [vmem:[#allocation2] sm:$0xf]
    %v82 = vld [vmem:[#allocation5] sm:$0xf]
    %v83 = vld [vmem:[#allocation5 + $0x4] sm:$0xf]
    %v84 = vld [vmem:[#allocation5 + $0x8] sm:$0xf]
    %v85 = vld [vmem:[#allocation5 + $0xc] sm:$0xf]
    %v86 = vld [vmem:[#allocation5 + $0x10] sm:$0xf]
    %v87 = vld [vmem:[#allocation5 + $0x14] sm:$0xf]
    %v88 = vld [vmem:[#allocation5 + $0x18] sm:$0xf]
    %v89 = vld [vmem:[#allocation5 + $0x1c] sm:$0xf]
    %v90 = vld [vmem:[#allocation5 + $0x20] sm:$0xf]
    %v91 = vld [vmem:[#allocation5 + $0x24] sm:$0xf]
    %v92 = vld [vmem:[#allocation5 + $0x28] sm:$0xf]
    %v93 = vld [vmem:[#allocation5 + $0x2c] sm:$0xf]
    %v94 = vld [vmem:[#allocation5 + $0x30] sm:$0xf]
    %v95 = vld [vmem:[#allocation5 + $0x34] sm:$0xf]
    %v96 = vld [vmem:[#allocation5 + $0x38] sm:$0xf]
    %v97 = vld [vmem:[#allocation5 + $0x3c] sm:$0xf]
    %v98 = vld [vmem:[%s2] sm:$0x1]
    %v100 = vlaneseq
    %v101 = vshrl.u32 %v100, 7
    %v102 = vsub.s32 0, %v101
    %v103 = vrot.slane %v98, %v102
    %v121 = vunpack.c.l.b16 %v82
    %v122 = vunpack.c.l.b16 %v83
    %v123 = vunpack.c.l.b16 %v84
    %v124 = vunpack.c.l.b16 %v85
    %v125 = vunpack.c.l.b16 %v86
    %v126 = vunpack.c.l.b16 %v87
    %v127 = vunpack.c.l.b16 %v88
    %v128 = vunpack.c.l.b16 %v89
    %v129 = vunpack.c.l.b16 %v90
    %v130 = vunpack.c.l.b16 %v91
    %v131 = vunpack.c.l.b16 %v92
    %v132 = vunpack.c.l.b16 %v93
    %v133 = vunpack.c.l.b16 %v94
    %v134 = vunpack.c.l.b16 %v95
    %v135 = vunpack.c.l.b16 %v96
    %v136 = vunpack.c.l.b16 %v97
    %v137 = vpack.c.b16 %v122, %v121
    %v138 = vpack.c.b16 %v124, %v123
    %v139 = vpack.c.b16 %v126, %v125
    %v140 = vpack.c.b16 %v128, %v127
    %v141 = vpack.c.b16 %v130, %v129
    %v142 = vpack.c.b16 %v132, %v131
    %v143 = vpack.c.b16 %v134, %v133
    %v144 = vpack.c.b16 %v136, %v135
    %153 = vmatprep.subr.bf16.mxu0 0
    %154 = vmatpush1.bf16.msra.mxu0 %v144
    %155 = vmatprep.subr.bf16.mxu0 0
    %156 = vmatpush1.bf16.msra.mxu0 %v143
    %157 = vmatprep.subr.bf16.mxu0 0
    %158 = vmatpush1.bf16.msra.mxu0 %v142
    %159 = vmatprep.subr.bf16.mxu0 0
    %160 = vmatpush1.bf16.msra.mxu0 %v141
    %161 = vmatprep.subr.bf16.mxu0 0
    %162 = vmatpush1.bf16.msra.mxu0 %v140
    %163 = vmatprep.subr.bf16.mxu0 0
    %164 = vmatpush1.bf16.msra.mxu0 %v139
    %165 = vmatprep.subr.bf16.mxu0 0
    %166 = vmatpush1.bf16.msra.mxu0 %v138
    %167 = vmatprep.subr.bf16.mxu0 0
    %168 = vmatpush1.bf16.msra.mxu0 %v137
    %169 = vmatprep.subr.bf16.mxu0 0
    %170 = vmatpush2.bf16.msra.mxu0 0
    %171 = vmatprep.subr.bf16.mxu0 0
    %172 = vmatpush2.bf16.msra.mxu0 0
    %173 = vmatprep.subr.bf16.mxu0 0
    %174 = vmatpush2.bf16.msra.mxu0 0
    %175 = vmatprep.subr.bf16.mxu0 0
    %176 = vmatpush2.bf16.msra.mxu0 0
    %177 = vmatprep.subr.bf16.mxu0 0
    %178 = vmatpush2.bf16.msra.mxu0 0
    %179 = vmatprep.subr.bf16.mxu0 0
    %180 = vmatpush2.bf16.msra.mxu0 0
    %181 = vmatprep.subr.bf16.mxu0 0
    %182 = vmatpush2.bf16.msra.mxu0 0
    %183 = vmatprep.subr.bf16.mxu0 0
    %184 = vmatpush2.bf16.msra.mxu0 0
    %185 = vmatprep.mubr.bf16.mxu0 0
    %186 = vmatmul.mubr.bf16.gmra.mxu0 %v81
    %v187 = vpop.f32.mrf.mxu0
    %v188 = vadd.f32 %v103, %v187
    %v189 = vpop.f32.mrf.mxu0
    %v190 = vpop.f32.mrf.mxu0
    %v191 = vpop.f32.mrf.mxu0
    %192 = vdwg.mxu0
    %v193 = vmul.f32 %v188, 0.2
    %v194 = vmax.f32 %v188, %v193
    %v195 = vpack.c.bf16 %v194, %v194
    %v196 = vld [vmem:[#allocation7] sm:$0xf]
    %v197 = vld [vmem:[#allocation7 + $0x4] sm:$0xf]
    %v198 = vld [vmem:[#allocation7 + $0x8] sm:$0xf]
    %v199 = vld [vmem:[#allocation7 + $0xc] sm:$0xf]
    %v200 = vld [vmem:[#allocation7 + $0x10] sm:$0xf]
    %v201 = vld [vmem:[#allocation7 + $0x14] sm:$0xf]
    %v202 = vld [vmem:[#allocation7 + $0x18] sm:$0xf]
    %v203 = vld [vmem:[#allocation7 + $0x1c] sm:$0xf]
    %v204 = vld [vmem:[#allocation7 + $0x20] sm:$0xf]
    %v205 = vld [vmem:[#allocation7 + $0x24] sm:$0xf]
    %v206 = vld [vmem:[#allocation7 + $0x28] sm:$0xf]
    %v207 = vld [vmem:[#allocation7 + $0x2c] sm:$0xf]
    %v208 = vld [vmem:[#allocation7 + $0x30] sm:$0xf]
    %v209 = vld [vmem:[#allocation7 + $0x34] sm:$0xf]
    %v210 = vld [vmem:[#allocation7 + $0x38] sm:$0xf]
    %v211 = vld [vmem:[#allocation7 + $0x3c] sm:$0xf]
    %v212 = vld [vmem:[%s4] sm:$0x1]
    %v214 = vlaneseq
    %v215 = vshrl.u32 %v214, 7
    %v216 = vsub.s32 0, %v215
    %v217 = vrot.slane %v212, %v216
    %v235 = vunpack.c.l.b16 %v196
    %v236 = vunpack.c.l.b16 %v197
    %v237 = vunpack.c.l.b16 %v198
    %v238 = vunpack.c.l.b16 %v199
    %v239 = vunpack.c.l.b16 %v200
    %v240 = vunpack.c.l.b16 %v201
    %v241 = vunpack.c.l.b16 %v202
    %v242 = vunpack.c.l.b16 %v203
    %v243 = vunpack.c.l.b16 %v204
    %v244 = vunpack.c.l.b16 %v205
    %v245 = vunpack.c.l.b16 %v206
    %v246 = vunpack.c.l.b16 %v207
    %v247 = vunpack.c.l.b16 %v208
    %v248 = vunpack.c.l.b16 %v209
    %v249 = vunpack.c.l.b16 %v210
    %v250 = vunpack.c.l.b16 %v211
    %v251 = vpack.c.b16 %v236, %v235
    %v252 = vpack.c.b16 %v238, %v237
    %v253 = vpack.c.b16 %v240, %v239
    %v254 = vpack.c.b16 %v242, %v241
    %v255 = vpack.c.b16 %v244, %v243
    %v256 = vpack.c.b16 %v246, %v245
    %v257 = vpack.c.b16 %v248, %v247
    %v258 = vpack.c.b16 %v250, %v249
    %267 = vmatprep.subr.bf16.mxu0 0
    %268 = vmatpush1.bf16.msra.mxu0 %v258
    %269 = vmatprep.subr.bf16.mxu0 0
    %270 = vmatpush1.bf16.msra.mxu0 %v257
    %271 = vmatprep.subr.bf16.mxu0 0
    %272 = vmatpush1.bf16.msra.mxu0 %v256
    %273 = vmatprep.subr.bf16.mxu0 0
    %274 = vmatpush1.bf16.msra.mxu0 %v255
    %275 = vmatprep.subr.bf16.mxu0 0
    %276 = vmatpush1.bf16.msra.mxu0 %v254
    %277 = vmatprep.subr.bf16.mxu0 0
    %278 = vmatpush1.bf16.msra.mxu0 %v253
    %279 = vmatprep.subr.bf16.mxu0 0
    %280 = vmatpush1.bf16.msra.mxu0 %v252
    %281 = vmatprep.subr.bf16.mxu0 0
    %282 = vmatpush1.bf16.msra.mxu0 %v251
    %283 = vmatprep.subr.bf16.mxu0 0
    %284 = vmatpush2.bf16.msra.mxu0 0
    %285 = vmatprep.subr.bf16.mxu0 0
    %286 = vmatpush2.bf16.msra.mxu0 0
    %287 = vmatprep.subr.bf16.mxu0 0
    %288 = vmatpush2.bf16.msra.mxu0 0
    %289 = vmatprep.subr.bf16.mxu0 0
    %290 = vmatpush2.bf16.msra.mxu0 0
    %291 = vmatprep.subr.bf16.mxu0 0
    %292 = vmatpush2.bf16.msra.mxu0 0
    %293 = vmatprep.subr.bf16.mxu0 0
    %294 = vmatpush2.bf16.msra.mxu0 0
    %295 = vmatprep.subr.bf16.mxu0 0
    %296 = vmatpush2.bf16.msra.mxu0 0
    %297 = vmatprep.subr.bf16.mxu0 0
    %298 = vmatpush2.bf16.msra.mxu0 0
    %299 = vmatprep.mubr.bf16.mxu0 0
    %300 = vmatmul.mubr.bf16.gmra.mxu0 %v195
    %v301 = vpop.f32.mrf.mxu0
    %v302 = vadd.f32 %v217, %v301
    %v303 = vpop.f32.mrf.mxu0
    %v304 = vpop.f32.mrf.mxu0
    %v305 = vpop.f32.mrf.mxu0
    %306 = vdwg.mxu0
    %v307 = vmul.f32 %v302, 0.2
    %v308 = vmax.f32 %v302, %v307
    %v309 = vpack.c.bf16 %v308, %v308
    %v310 = vld [vmem:[#allocation8] sm:$0xf]
    %v311 = vld [vmem:[#allocation8 + $0x4] sm:$0xf]
    %v312 = vld [vmem:[#allocation8 + $0x8] sm:$0xf]
    %v313 = vld [vmem:[#allocation8 + $0xc] sm:$0xf]
    %v314 = vld [vmem:[#allocation8 + $0x10] sm:$0xf]
    %v315 = vld [vmem:[#allocation8 + $0x14] sm:$0xf]
    %v316 = vld [vmem:[#allocation8 + $0x18] sm:$0xf]
    %v317 = vld [vmem:[#allocation8 + $0x1c] sm:$0xf]
    %v318 = vld [vmem:[#allocation8 + $0x20] sm:$0xf]
    %v319 = vld [vmem:[#allocation8 + $0x24] sm:$0xf]
    %v320 = vld [vmem:[#allocation8 + $0x28] sm:$0xf]
    %v321 = vld [vmem:[#allocation8 + $0x2c] sm:$0xf]
    %v322 = vld [vmem:[#allocation8 + $0x30] sm:$0xf]
    %v323 = vld [vmem:[#allocation8 + $0x34] sm:$0xf]
    %v324 = vld [vmem:[#allocation8 + $0x38] sm:$0xf]
    %v325 = vld [vmem:[#allocation8 + $0x3c] sm:$0xf]
    %v326 = vld [vmem:[%s6] sm:$0x1]
    %v328 = vlaneseq
    %v329 = vshrl.u32 %v328, 7
    %v330 = vsub.s32 0, %v329
    %v331 = vrot.slane %v326, %v330
    %v349 = vunpack.c.l.b16 %v310
    %v350 = vunpack.c.l.b16 %v311
    %v351 = vunpack.c.l.b16 %v312
    %v352 = vunpack.c.l.b16 %v313
    %v353 = vunpack.c.l.b16 %v314
    %v354 = vunpack.c.l.b16 %v315
    %v355 = vunpack.c.l.b16 %v316
    %v356 = vunpack.c.l.b16 %v317
    %v357 = vunpack.c.l.b16 %v318
    %v358 = vunpack.c.l.b16 %v319
    %v359 = vunpack.c.l.b16 %v320
    %v360 = vunpack.c.l.b16 %v321
    %v361 = vunpack.c.l.b16 %v322
    %v362 = vunpack.c.l.b16 %v323
    %v363 = vunpack.c.l.b16 %v324
    %v364 = vunpack.c.l.b16 %v325
    %v365 = vpack.c.b16 %v350, %v349
    %v366 = vpack.c.b16 %v352, %v351
    %v367 = vpack.c.b16 %v354, %v353
    %v368 = vpack.c.b16 %v356, %v355
    %v369 = vpack.c.b16 %v358, %v357
    %v370 = vpack.c.b16 %v360, %v359
    %v371 = vpack.c.b16 %v362, %v361
    %v372 = vpack.c.b16 %v364, %v363
    %381 = vmatprep.subr.bf16.mxu0 0
    %382 = vmatpush1.bf16.msra.mxu0 %v372
    %383 = vmatprep.subr.bf16.mxu0 0
    %384 = vmatpush1.bf16.msra.mxu0 %v371
    %385 = vmatprep.subr.bf16.mxu0 0
    %386 = vmatpush1.bf16.msra.mxu0 %v370
    %387 = vmatprep.subr.bf16.mxu0 0
    %388 = vmatpush1.bf16.msra.mxu0 %v369
    %389 = vmatprep.subr.bf16.mxu0 0
    %390 = vmatpush1.bf16.msra.mxu0 %v368
    %391 = vmatprep.subr.bf16.mxu0 0
    %392 = vmatpush1.bf16.msra.mxu0 %v367
    %393 = vmatprep.subr.bf16.mxu0 0
    %394 = vmatpush1.bf16.msra.mxu0 %v366
    %395 = vmatprep.subr.bf16.mxu0 0
    %396 = vmatpush1.bf16.msra.mxu0 %v365
    %397 = vmatprep.subr.bf16.mxu0 0
    %398 = vmatpush2.bf16.msra.mxu0 0
    %399 = vmatprep.subr.bf16.mxu0 0
    %400 = vmatpush2.bf16.msra.mxu0 0
    %401 = vmatprep.subr.bf16.mxu0 0
    %402 = vmatpush2.bf16.msra.mxu0 0
    %403 = vmatprep.subr.bf16.mxu0 0
    %404 = vmatpush2.bf16.msra.mxu0 0
    %405 = vmatprep.subr.bf16.mxu0 0
    %406 = vmatpush2.bf16.msra.mxu0 0
    %407 = vmatprep.subr.bf16.mxu0 0
    %408 = vmatpush2.bf16.msra.mxu0 0
    %409 = vmatprep.subr.bf16.mxu0 0
    %410 = vmatpush2.bf16.msra.mxu0 0
    %411 = vmatprep.subr.bf16.mxu0 0
    %412 = vmatpush2.bf16.msra.mxu0 0
    %413 = vmatprep.mubr.bf16.mxu0 0
    %414 = vmatmul.mubr.bf16.gmra.mxu0 %v309
    %v415 = vpop.f32.mrf.mxu0
    %v416 = vadd.f32 %v331, %v415
    %v417 = vpop.f32.mrf.mxu0
    %v418 = vpop.f32.mrf.mxu0
    %v419 = vpop.f32.mrf.mxu0
    %420 = vdwg.mxu0
    %v421 = vxor.u32 %v416, 2147483648
    %v422 = vmul.f32 %v421, 1.442695
    %v423 = vpow.pop %v422
    %v424 = vadd.f32 %v423, 1.0
    %v425 = vrcp.pop %v424
    %v426 = vmul.f32 1.0, %v425
    %427 = vst [vmem:[#allocation10] sm:$0xff] %v426
    // Predicated region
    $region46: #{tpu_custom_call.1} parent=1 // pred_check
      _
    $region47: #{tpu_custom_call.1} parent=1 // pred_check_branch
      %429 = sbr.rel (0) target = $region49
    $region48: #{tpu_custom_call.1} parent=1 // pred_region
      %s431 = ssub.s32 128, 128
      %432 = vsyncadd [#allocation4], %s431
      %s434 = sshll.u32 [#allocation10], 4
      %s435 = int_to_ptr.vmem [resolvable:$true] %s434
      %437 = dma.vmem_to_hbm [thread:$0]  %s435, 128, %s7, [#allocation4]
    $region49: #{tpu_custom_call.1} parent=1 // pred_fallthru
      _
    // Predicated region
    $region50: #{tpu_custom_call.1} parent=1 // pred_check
      _
    $region51: #{tpu_custom_call.1} parent=1 // pred_check_branch
      %439 = sbr.rel (0) target = $region53
    $region52: #{tpu_custom_call.1} parent=1 // pred_region
      %440 = dma.done [#allocation4], 128
    $region53: #{tpu_custom_call.1} parent=1 // pred_fallthru
      _
    %441 = vsyncpa [#allocation3], 1
    %442 = vsyncpa [#allocation6], 1
    %443 = vsyncpa [#allocation9], 1
    %444 = vsyncpa [#allocation4], 1

// kernel: tpu_custom_call.1
$region0: #{tpu_custom_call.1}
  #allocation0 [shape = 'u32[]', space=smem, size = 0x4, offset = 0x4, fixed_abs, tag = 'smem constant byte address 0x4 - core index']
  #allocation1 [shape = 'u32[144,128]{1,0:T(1,128)}', space=vmem, size = 0x12000, scoped, tag = 'internal scratch']
  %s0 = inlined_call_operand.hbm [shape: bf16[8,128], index: 0, kind: input, shape index: {}]
  %s1 = inlined_call_operand.hbm [shape: bf16[128,128], index: 1, kind: input, shape index: {}]
  %s2 = inlined_call_operand.vmem [shape: f32[1,128], index: 2, kind: input, shape index: {}]
  %s3 = inlined_call_operand.hbm [shape: bf16[128,128], index: 3, kind: input, shape index: {}]
  %s4 = inlined_call_operand.vmem [shape: f32[1,128], index: 4, kind: input, shape index: {}]
  %s5 = inlined_call_operand.hbm [shape: bf16[128,128], index: 5, kind: input, shape index: {}]
  %s6 = inlined_call_operand.vmem [shape: f32[1,128], index: 6, kind: input, shape index: {}]
  %s7 = inlined_call_operand.hbm [shape: f32[8,128], index: 7, kind: output, shape index: {}]
  %s8 = sld [smem:[#allocation0]]
  $region54: #{tpu_custom_call.1} parent=0
    _
  %s10 = ssub.s32 1, %s8
  %s11 = scalar_select 0, %s10, %s8
  $region1: #{tpu_custom_call.1} parent=0
    #allocation2 [shape = 'u8[2048]{0}', space=vmem, size = 0x800, scoped, tag = 'input window, operand 0, single buffered']
    #allocation3 [shape = 's32[1]{0}', space=sflag, size = 0x4, scoped, tag = 'scoped memory for tpu_custom_call.1']
    #allocation4 [shape = 's32[1]{0}', space=sflag, size = 0x4, scoped, tag = 'scoped memory for tpu_custom_call.1']
    #allocation5 [shape = 'u8[32768]{0}', space=vmem, size = 0x8000, scoped, tag = 'input window, operand 1, single buffered']
    #allocation6 [shape = 's32[1]{0}', space=sflag, size = 0x4, scoped, tag = 'scoped memory for tpu_custom_call.1']
    #allocation7 [shape = 'u8[32768]{0}', space=vmem, size = 0x8000, scoped, tag = 'input window, operand 3, single buffered']
    #allocation8 [shape = 'u8[32768]{0}', space=vmem, size = 0x8000, scoped, tag = 'input window, operand 5, single buffered']
    #allocation9 [shape = 's32[1]{0}', space=sflag, size = 0x4, scoped, tag = 'scoped memory for tpu_custom_call.1']
    #allocation10 [shape = 'u8[4096]{0}', space=vmem, size = 0x1000, scoped, tag = 'output window, operand 0, single buffered']
    %12 = vsyncpa [#allocation3], 0
    %13 = vsyncpa [#allocation6], 0
    %14 = vsyncpa [#allocation9], 0
    %15 = vsyncpa [#allocation4], 0
    // Predicated region
    $region2: #{tpu_custom_call.1} parent=1 // pred_check
      _
    $region3: #{tpu_custom_call.1} parent=1 // pred_check_branch
      %17 = sbr.rel (0) target = $region5
    $region4: #{tpu_custom_call.1} parent=1 // pred_region
      %s19 = ssub.s32 64, 64
      %20 = vsyncadd [#allocation3], %s19
      %s22 = sshll.u32 [#allocation2], 4
      %s23 = int_to_ptr.vmem [resolvable:$true] %s22
      %25 = dma.hbm_to_vmem [thread:$0]  %s0, 64, %s23, [#allocation3]
    $region5: #{tpu_custom_call.1} parent=1 // pred_fallthru
      _
    // Predicated region
    $region6: #{tpu_custom_call.1} parent=1 // pred_check
      _
    $region7: #{tpu_custom_call.1} parent=1 // pred_check_branch
      %27 = sbr.rel (0) target = $region9
    $region8: #{tpu_custom_call.1} parent=1 // pred_region
      %s29 = ssub.s32 1024, 1024
      %30 = vsyncadd [#allocation6], %s29
      %s31 = sshll.u32 [#allocation5], 4
      %s32 = int_to_ptr.vmem [resolvable:$true] %s31
      %37 = dma.hbm_to_vmem [thread:$0]  %s1, 1024, %s32, [#allocation6], 64, 64, 4
    $region9: #{tpu_custom_call.1} parent=1 // pred_fallthru
      _
    // Predicated region
    $region10: #{tpu_custom_call.1} parent=1 // pred_check
      _
    $region11: #{tpu_custom_call.1} parent=1 // pred_check_branch
      %39 = sbr.rel (0) target = $region13
    $region12: #{tpu_custom_call.1} parent=1 // pred_region
      _
    $region13: #{tpu_custom_call.1} parent=1 // pred_fallthru
      _
    // Predicated region
    $region14: #{tpu_custom_call.1} parent=1 // pred_check
      _
    $region15: #{tpu_custom_call.1} parent=1 // pred_check_branch
      %41 = sbr.rel (0) target = $region17
    $region16: #{tpu_custom_call.1} parent=1 // pred_region
      %s43 = ssub.s32 1024, 1024
      %44 = vsyncadd [#allocation6], %s43
      %s45 = sshll.u32 [#allocation7], 4
      %s46 = int_to_ptr.vmem [resolvable:$true] %s45
      %51 = dma.hbm_to_vmem [thread:$0]  %s3, 1024, %s46, [#allocation6], 64, 64, 4
    $region17: #{tpu_custom_call.1} parent=1 // pred_fallthru
      _
    // Predicated region
    $region18: #{tpu_custom_call.1} parent=1 // pred_check
      _
    $region19: #{tpu_custom_call.1} parent=1 // pred_check_branch
      %53 = sbr.rel (0) target = $region21
    $region20: #{tpu_custom_call.1} parent=1 // pred_region
      _
    $region21: #{tpu_custom_call.1} parent=1 // pred_fallthru
      _
    // Predicated region
    $region22: #{tpu_custom_call.1} parent=1 // pred_check
      _
    $region23: #{tpu_custom_call.1} parent=1 // pred_check_branch
      %55 = sbr.rel (0) target = $region25
    $region24: #{tpu_custom_call.1} parent=1 // pred_region
      %s57 = ssub.s32 1024, 1024
      %58 = vsyncadd [#allocation9], %s57
      %s59 = sshll.u32 [#allocation8], 4
      %s60 = int_to_ptr.vmem [resolvable:$true] %s59
      %65 = dma.hbm_to_vmem [thread:$0]  %s5, 1024, %s60, [#allocation9], 64, 64, 4
    $region25: #{tpu_custom_call.1} parent=1 // pred_fallthru
      _
    // Predicated region
    $region26: #{tpu_custom_call.1} parent=1 // pred_check
      _
    $region27: #{tpu_custom_call.1} parent=1 // pred_check_branch
      %67 = sbr.rel (0) target = $region29
    $region28: #{tpu_custom_call.1} parent=1 // pred_region
      _
    $region29: #{tpu_custom_call.1} parent=1 // pred_fallthru
      _
    // Predicated region
    $region30: #{tpu_custom_call.1} parent=1 // pred_check
      _
    $region31: #{tpu_custom_call.1} parent=1 // pred_check_branch
      %69 = sbr.rel (0) target = $region33
    $region32: #{tpu_custom_call.1} parent=1 // pred_region
      %70 = dma.done [#allocation3], 64
    $region33: #{tpu_custom_call.1} parent=1 // pred_fallthru
      _
    // Predicated region
    $region34: #{tpu_custom_call.1} parent=1 // pred_check
      _
    $region35: #{tpu_custom_call.1} parent=1 // pred_check_branch
      %72 = sbr.rel (0) target = $region37
    $region36: #{tpu_custom_call.1} parent=1 // pred_region
      %73 = dma.done [#allocation6], 1024
    $region37: #{tpu_custom_call.1} parent=1 // pred_fallthru
      _
    // Predicated region
    $region38: #{tpu_custom_call.1} parent=1 // pred_check
      _
    $region39: #{tpu_custom_call.1} parent=1 // pred_check_branch
      %75 = sbr.rel (0) target = $region41
    $region40: #{tpu_custom_call.1} parent=1 // pred_region
      %76 = dma.done [#allocation6], 1024
    $region41: #{tpu_custom_call.1} parent=1 // pred_fallthru
      _
    // Predicated region
    $region42: #{tpu_custom_call.1} parent=1 // pred_check
      _
    $region43: #{tpu_custom_call.1} parent=1 // pred_check_branch
      %78 = sbr.rel (0) target = $region45
    $region44: #{tpu_custom_call.1} parent=1 // pred_region
      %79 = dma.done [#allocation9], 1024
    $region45: #{tpu_custom_call.1} parent=1 // pred_fallthru
      _
    %v81 = vld [vmem:[#allocation2] sm:$0xf]
    %v82 = vld [vmem:[#allocation5] sm:$0xf]
    %v83 = vld [vmem:[#allocation5 + $0x4] sm:$0xf]
    %v84 = vld [vmem:[#allocation5 + $0x8] sm:$0xf]
    %v85 = vld [vmem:[#allocation5 + $0xc] sm:$0xf]
    %v86 = vld [vmem:[#allocation5 + $0x10] sm:$0xf]
    %v87 = vld [vmem:[#allocation5 + $0x14] sm:$0xf]
    %v88 = vld [vmem:[#allocation5 + $0x18] sm:$0xf]
    %v89 = vld [vmem:[#allocation5 + $0x1c] sm:$0xf]
    %v90 = vld [vmem:[#allocation5 + $0x20] sm:$0xf]
    %v91 = vld [vmem:[#allocation5 + $0x24] sm:$0xf]
    %v92 = vld [vmem:[#allocation5 + $0x28] sm:$0xf]
    %v93 = vld [vmem:[#allocation5 + $0x2c] sm:$0xf]
    %v94 = vld [vmem:[#allocation5 + $0x30] sm:$0xf]
    %v95 = vld [vmem:[#allocation5 + $0x34] sm:$0xf]
    %v96 = vld [vmem:[#allocation5 + $0x38] sm:$0xf]
    %v97 = vld [vmem:[#allocation5 + $0x3c] sm:$0xf]
    %v98 = vld [vmem:[%s2] sm:$0x1]
    %v100 = vlaneseq
    %v101 = vshrl.u32 %v100, 7
    %v102 = vsub.s32 0, %v101
    %v103 = vrot.slane %v98, %v102
    %v121 = vunpack.c.l.b16 %v82
    %v122 = vunpack.c.l.b16 %v83
    %v123 = vunpack.c.l.b16 %v84
    %v124 = vunpack.c.l.b16 %v85
    %v125 = vunpack.c.l.b16 %v86
    %v126 = vunpack.c.l.b16 %v87
    %v127 = vunpack.c.l.b16 %v88
    %v128 = vunpack.c.l.b16 %v89
    %v129 = vunpack.c.l.b16 %v90
    %v130 = vunpack.c.l.b16 %v91
    %v131 = vunpack.c.l.b16 %v92
    %v132 = vunpack.c.l.b16 %v93
    %v133 = vunpack.c.l.b16 %v94
    %v134 = vunpack.c.l.b16 %v95
    %v135 = vunpack.c.l.b16 %v96
    %v136 = vunpack.c.l.b16 %v97
    %v137 = vpack.c.b16 %v122, %v121
    %v138 = vpack.c.b16 %v124, %v123
    %v139 = vpack.c.b16 %v126, %v125
    %v140 = vpack.c.b16 %v128, %v127
    %v141 = vpack.c.b16 %v130, %v129
    %v142 = vpack.c.b16 %v132, %v131
    %v143 = vpack.c.b16 %v134, %v133
    %v144 = vpack.c.b16 %v136, %v135
    %153 = vmatprep.subr.bf16.mxu0 0
    %154 = vmatpush1.bf16.msra.mxu0 %v144
    %155 = vmatprep.subr.bf16.mxu0 0
    %156 = vmatpush1.bf16.msra.mxu0 %v143
    %157 = vmatprep.subr.bf16.mxu0 0
    %158 = vmatpush1.bf16.msra.mxu0 %v142
    %159 = vmatprep.subr.bf16.mxu0 0
    %160 = vmatpush1.bf16.msra.mxu0 %v141
    %161 = vmatprep.subr.bf16.mxu0 0
    %162 = vmatpush1.bf16.msra.mxu0 %v140
    %163 = vmatprep.subr.bf16.mxu0 0
    %164 = vmatpush1.bf16.msra.mxu0 %v139
    %165 = vmatprep.subr.bf16.mxu0 0
    %166 = vmatpush1.bf16.msra.mxu0 %v138
    %167 = vmatprep.subr.bf16.mxu0 0
    %168 = vmatpush1.bf16.msra.mxu0 %v137
    %169 = vmatprep.subr.bf16.mxu0 0
    %170 = vmatpush2.bf16.msra.mxu0 0
    %171 = vmatprep.subr.bf16.mxu0 0
    %172 = vmatpush2.bf16.msra.mxu0 0
    %173 = vmatprep.subr.bf16.mxu0 0
    %174 = vmatpush2.bf16.msra.mxu0 0
    %175 = vmatprep.subr.bf16.mxu0 0
    %176 = vmatpush2.bf16.msra.mxu0 0
    %177 = vmatprep.subr.bf16.mxu0 0
    %178 = vmatpush2.bf16.msra.mxu0 0
    %179 = vmatprep.subr.bf16.mxu0 0
    %180 = vmatpush2.bf16.msra.mxu0 0
    %181 = vmatprep.subr.bf16.mxu0 0
    %182 = vmatpush2.bf16.msra.mxu0 0
    %183 = vmatprep.subr.bf16.mxu0 0
    %184 = vmatpush2.bf16.msra.mxu0 0
    %185 = vmatprep.mubr.bf16.mxu0 0
    %186 = vmatmul.mubr.bf16.gmra.mxu0 %v81
    %v187 = vpop.f32.mrf.mxu0
    %v188 = vadd.f32 %v103, %v187
    %v189 = vpop.f32.mrf.mxu0
    %v190 = vpop.f32.mrf.mxu0
    %v191 = vpop.f32.mrf.mxu0
    %192 = vdwg.mxu0
    %v193 = vmul.f32 %v188, 0.2
    %v194 = vmax.f32 %v188, %v193
    %v195 = vpack.c.bf16 %v194, %v194
    %v196 = vld [vmem:[#allocation7] sm:$0xf]
    %v197 = vld [vmem:[#allocation7 + $0x4] sm:$0xf]
    %v198 = vld [vmem:[#allocation7 + $0x8] sm:$0xf]
    %v199 = vld [vmem:[#allocation7 + $0xc] sm:$0xf]
    %v200 = vld [vmem:[#allocation7 + $0x10] sm:$0xf]
    %v201 = vld [vmem:[#allocation7 + $0x14] sm:$0xf]
    %v202 = vld [vmem:[#allocation7 + $0x18] sm:$0xf]
    %v203 = vld [vmem:[#allocation7 + $0x1c] sm:$0xf]
    %v204 = vld [vmem:[#allocation7 + $0x20] sm:$0xf]
    %v205 = vld [vmem:[#allocation7 + $0x24] sm:$0xf]
    %v206 = vld [vmem:[#allocation7 + $0x28] sm:$0xf]
    %v207 = vld [vmem:[#allocation7 + $0x2c] sm:$0xf]
    %v208 = vld [vmem:[#allocation7 + $0x30] sm:$0xf]
    %v209 = vld [vmem:[#allocation7 + $0x34] sm:$0xf]
    %v210 = vld [vmem:[#allocation7 + $0x38] sm:$0xf]
    %v211 = vld [vmem:[#allocation7 + $0x3c] sm:$0xf]
    %v212 = vld [vmem:[%s4] sm:$0x1]
    %v214 = vlaneseq
    %v215 = vshrl.u32 %v214, 7
    %v216 = vsub.s32 0, %v215
    %v217 = vrot.slane %v212, %v216
    %v235 = vunpack.c.l.b16 %v196
    %v236 = vunpack.c.l.b16 %v197
    %v237 = vunpack.c.l.b16 %v198
    %v238 = vunpack.c.l.b16 %v199
    %v239 = vunpack.c.l.b16 %v200
    %v240 = vunpack.c.l.b16 %v201
    %v241 = vunpack.c.l.b16 %v202
    %v242 = vunpack.c.l.b16 %v203
    %v243 = vunpack.c.l.b16 %v204
    %v244 = vunpack.c.l.b16 %v205
    %v245 = vunpack.c.l.b16 %v206
    %v246 = vunpack.c.l.b16 %v207
    %v247 = vunpack.c.l.b16 %v208
    %v248 = vunpack.c.l.b16 %v209
    %v249 = vunpack.c.l.b16 %v210
    %v250 = vunpack.c.l.b16 %v211
    %v251 = vpack.c.b16 %v236, %v235
    %v252 = vpack.c.b16 %v238, %v237
    %v253 = vpack.c.b16 %v240, %v239
    %v254 = vpack.c.b16 %v242, %v241
    %v255 = vpack.c.b16 %v244, %v243
    %v256 = vpack.c.b16 %v246, %v245
    %v257 = vpack.c.b16 %v248, %v247
    %v258 = vpack.c.b16 %v250, %v249
    %267 = vmatprep.subr.bf16.mxu0 0
    %268 = vmatpush1.bf16.msra.mxu0 %v258
    %269 = vmatprep.subr.bf16.mxu0 0
    %270 = vmatpush1.bf16.msra.mxu0 %v257
    %271 = vmatprep.subr.bf16.mxu0 0
    %272 = vmatpush1.bf16.msra.mxu0 %v256
    %273 = vmatprep.subr.bf16.mxu0 0
    %274 = vmatpush1.bf16.msra.mxu0 %v255
    %275 = vmatprep.subr.bf16.mxu0 0
    %276 = vmatpush1.bf16.msra.mxu0 %v254
    %277 = vmatprep.subr.bf16.mxu0 0
    %278 = vmatpush1.bf16.msra.mxu0 %v253
    %279 = vmatprep.subr.bf16.mxu0 0
    %280 = vmatpush1.bf16.msra.mxu0 %v252
    %281 = vmatprep.subr.bf16.mxu0 0
    %282 = vmatpush1.bf16.msra.mxu0 %v251
    %283 = vmatprep.subr.bf16.mxu0 0
    %284 = vmatpush2.bf16.msra.mxu0 0
    %285 = vmatprep.subr.bf16.mxu0 0
    %286 = vmatpush2.bf16.msra.mxu0 0
    %287 = vmatprep.subr.bf16.mxu0 0
    %288 = vmatpush2.bf16.msra.mxu0 0
    %289 = vmatprep.subr.bf16.mxu0 0
    %290 = vmatpush2.bf16.msra.mxu0 0
    %291 = vmatprep.subr.bf16.mxu0 0
    %292 = vmatpush2.bf16.msra.mxu0 0
    %293 = vmatprep.subr.bf16.mxu0 0
    %294 = vmatpush2.bf16.msra.mxu0 0
    %295 = vmatprep.subr.bf16.mxu0 0
    %296 = vmatpush2.bf16.msra.mxu0 0
    %297 = vmatprep.subr.bf16.mxu0 0
    %298 = vmatpush2.bf16.msra.mxu0 0
    %299 = vmatprep.mubr.bf16.mxu0 0
    %300 = vmatmul.mubr.bf16.gmra.mxu0 %v195
    %v301 = vpop.f32.mrf.mxu0
    %v302 = vadd.f32 %v217, %v301
    %v303 = vpop.f32.mrf.mxu0
    %v304 = vpop.f32.mrf.mxu0
    %v305 = vpop.f32.mrf.mxu0
    %306 = vdwg.mxu0
    %v307 = vmul.f32 %v302, 0.2
    %v308 = vmax.f32 %v302, %v307
    %v309 = vpack.c.bf16 %v308, %v308
    %v310 = vld [vmem:[#allocation8] sm:$0xf]
    %v311 = vld [vmem:[#allocation8 + $0x4] sm:$0xf]
    %v312 = vld [vmem:[#allocation8 + $0x8] sm:$0xf]
    %v313 = vld [vmem:[#allocation8 + $0xc] sm:$0xf]
    %v314 = vld [vmem:[#allocation8 + $0x10] sm:$0xf]
    %v315 = vld [vmem:[#allocation8 + $0x14] sm:$0xf]
    %v316 = vld [vmem:[#allocation8 + $0x18] sm:$0xf]
    %v317 = vld [vmem:[#allocation8 + $0x1c] sm:$0xf]
    %v318 = vld [vmem:[#allocation8 + $0x20] sm:$0xf]
    %v319 = vld [vmem:[#allocation8 + $0x24] sm:$0xf]
    %v320 = vld [vmem:[#allocation8 + $0x28] sm:$0xf]
    %v321 = vld [vmem:[#allocation8 + $0x2c] sm:$0xf]
    %v322 = vld [vmem:[#allocation8 + $0x30] sm:$0xf]
    %v323 = vld [vmem:[#allocation8 + $0x34] sm:$0xf]
    %v324 = vld [vmem:[#allocation8 + $0x38] sm:$0xf]
    %v325 = vld [vmem:[#allocation8 + $0x3c] sm:$0xf]
    %v326 = vld [vmem:[%s6] sm:$0x1]
    %v328 = vlaneseq
    %v329 = vshrl.u32 %v328, 7
    %v330 = vsub.s32 0, %v329
    %v331 = vrot.slane %v326, %v330
    %v349 = vunpack.c.l.b16 %v310
    %v350 = vunpack.c.l.b16 %v311
    %v351 = vunpack.c.l.b16 %v312
    %v352 = vunpack.c.l.b16 %v313
    %v353 = vunpack.c.l.b16 %v314
    %v354 = vunpack.c.l.b16 %v315
    %v355 = vunpack.c.l.b16 %v316
    %v356 = vunpack.c.l.b16 %v317
    %v357 = vunpack.c.l.b16 %v318
    %v358 = vunpack.c.l.b16 %v319
    %v359 = vunpack.c.l.b16 %v320
    %v360 = vunpack.c.l.b16 %v321
    %v361 = vunpack.c.l.b16 %v322
    %v362 = vunpack.c.l.b16 %v323
    %v363 = vunpack.c.l.b16 %v324
    %v364 = vunpack.c.l.b16 %v325
    %v365 = vpack.c.b16 %v350, %v349
    %v366 = vpack.c.b16 %v352, %v351
    %v367 = vpack.c.b16 %v354, %v353
    %v368 = vpack.c.b16 %v356, %v355
    %v369 = vpack.c.b16 %v358, %v357
    %v370 = vpack.c.b16 %v360, %v359
    %v371 = vpack.c.b16 %v362, %v361
    %v372 = vpack.c.b16 %v364, %v363
    %381 = vmatprep.subr.bf16.mxu0 0
    %382 = vmatpush1.bf16.msra.mxu0 %v372
    %383 = vmatprep.subr.bf16.mxu0 0
    %384 = vmatpush1.bf16.msra.mxu0 %v371
    %385 = vmatprep.subr.bf16.mxu0 0
    %386 = vmatpush1.bf16.msra.mxu0 %v370
    %387 = vmatprep.subr.bf16.mxu0 0
    %388 = vmatpush1.bf16.msra.mxu0 %v369
    %389 = vmatprep.subr.bf16.mxu0 0
    %390 = vmatpush1.bf16.msra.mxu0 %v368
    %391 = vmatprep.subr.bf16.mxu0 0
    %392 = vmatpush1.bf16.msra.mxu0 %v367
    %393 = vmatprep.subr.bf16.mxu0 0
    %394 = vmatpush1.bf16.msra.mxu0 %v366
    %395 = vmatprep.subr.bf16.mxu0 0
    %396 = vmatpush1.bf16.msra.mxu0 %v365
    %397 = vmatprep.subr.bf16.mxu0 0
    %398 = vmatpush2.bf16.msra.mxu0 0
    %399 = vmatprep.subr.bf16.mxu0 0
    %400 = vmatpush2.bf16.msra.mxu0 0
    %401 = vmatprep.subr.bf16.mxu0 0
    %402 = vmatpush2.bf16.msra.mxu0 0
    %403 = vmatprep.subr.bf16.mxu0 0
    %404 = vmatpush2.bf16.msra.mxu0 0
    %405 = vmatprep.subr.bf16.mxu0 0
    %406 = vmatpush2.bf16.msra.mxu0 0
    %407 = vmatprep.subr.bf16.mxu0 0
    %408 = vmatpush2.bf16.msra.mxu0 0
    %409 = vmatprep.subr.bf16.mxu0 0
    %410 = vmatpush2.bf16.msra.mxu0 0
    %411 = vmatprep.subr.bf16.mxu0 0
    %412 = vmatpush2.bf16.msra.mxu0 0
    %413 = vmatprep.mubr.bf16.mxu0 0
    %414 = vmatmul.mubr.bf16.gmra.mxu0 %v309
    %v415 = vpop.f32.mrf.mxu0
    %v416 = vadd.f32 %v331, %v415
    %v417 = vpop.f32.mrf.mxu0
    %v418 = vpop.f32.mrf.mxu0
    %v419 = vpop.f32.mrf.mxu0
    %420 = vdwg.mxu0
    %v421 = vxor.u32 %v416, 2147483648
    %v422 = vmul.f32 %v421, 1.442695
    %v423 = vpow.pop %v422
    %v424 = vadd.f32 %v423, 1.0
    %v425 = vrcp.pop %v424
    %v426 = vmul.f32 1.0, %v425
    %427 = vst [vmem:[#allocation10] sm:$0xff] %v426
    // Predicated region
    $region46: #{tpu_custom_call.1} parent=1 // pred_check
      _
    $region47: #{tpu_custom_call.1} parent=1 // pred_check_branch
      %429 = sbr.rel (0) target = $region49
    $region48: #{tpu_custom_call.1} parent=1 // pred_region
      %s431 = ssub.s32 128, 128
      %432 = vsyncadd [#allocation4], %s431
      %s434 = sshll.u32 [#allocation10], 4
      %s435 = int_to_ptr.vmem [resolvable:$true] %s434
      %437 = dma.vmem_to_hbm [thread:$0]  %s435, 128, %s7, [#allocation4]
    $region49: #{tpu_custom_call.1} parent=1 // pred_fallthru
      _
    // Predicated region
    $region50: #{tpu_custom_call.1} parent=1 // pred_check
      _
    $region51: #{tpu_custom_call.1} parent=1 // pred_check_branch
      %439 = sbr.rel (0) target = $region53
    $region52: #{tpu_custom_call.1} parent=1 // pred_region
      %440 = dma.done [#allocation4], 128
    $region53: #{tpu_custom_call.1} parent=1 // pred_fallthru
      _
    %441 = vsyncpa [#allocation3], 1
    %442 = vsyncpa [#allocation6], 1
    %443 = vsyncpa [#allocation9], 1
    %444 = vsyncpa [#allocation4], 1

</llo_original>
